<compile_context>
chip_gen: v7x
topology: tpu7x:2x2x1
jax: 0.10.0
libtpu: 0.0.40
codegen_flags: <defaults>
</compile_context>

<pallas_src>
import functools

import jax
import jax.numpy as jnp
from jax.experimental import pallas as pl
from jax.experimental.pallas import tpu as pltpu


def _round_up(n, m):
    return ((n + m - 1) // m) * m


def _dar_kernel(num_layers, *refs):
    """refs = (x_ref, w0, b0, ..., w_last, b_last, o_ref).

    x_ref:  (d_in, tile_m)      activations, batch on lanes
    w_i:    (d_out_i, d_in_i)   hidden layers, natural torch layout
    b_i:    (d_out_i, 1)
    w_last: (d_last, 1)         final layer stored as a column
    b_last: (1, 1)
    o_ref:  (1, tile_m)         lane-dense output row
    """
    x_ref = refs[0]
    o_ref = refs[-1]
    h = x_ref[...]  # f32 (d_in, tile_m)

    # layer_1 + mid layers: MXU matmul (f32 accumulation), bias add, ReLU.
    for i in range(num_layers - 1):
        w = refs[1 + 2 * i][...]          # (d_out, d_in)
        b = refs[2 + 2 * i][...]          # (d_out, 1) -> broadcast along lanes
        h = jnp.dot(w, h, preferred_element_type=jnp.float32) + b
        h = jnp.maximum(h, 0.0)

    # layer_out (d_out == 1): VPU multiply + cross-sublane reduce keeps the
    # result lane-dense and skips a 1-wide MXU pass.  No activation (matches
    # DAR.forward; also covers the num_layers == 1 pure-Linear path).
    w_out = refs[1 + 2 * (num_layers - 1)][...]   # (d_last, 1)
    b_out = refs[2 + 2 * (num_layers - 1)][...]   # (1, 1)
    y = jnp.sum(h * w_out, axis=0, keepdims=True) + b_out   # (1, tile_m)
    o_ref[...] = y.astype(o_ref.dtype)


def dar_forward(x, weights, biases, *, max_tile=512):
    """Fused DAR forward.

    x:       (batch, ar) float32
    weights: torch-layout weights, weights[i] shape (d_out_i, d_in_i)
    biases:  biases, biases[i] shape (d_out_i,)
    returns  (batch, 1), same as DAR.forward.
    """
    num_layers = len(weights)
    batch, d_in = x.shape
    assert weights[0].shape[1] == d_in
    assert weights[-1].shape[0] == 1

    # Batch goes on the lane axis: tile in multiples of 128, up to max_tile.
    tile_m = min(max_tile, _round_up(max(batch, 1), 128))
    m_pad = _round_up(batch, tile_m)
    num_tiles = m_pad // tile_m

    xt = jnp.pad(x.T, ((0, 0), (0, m_pad - batch)))  # (d_in, m_pad)

    args = [xt]
    in_specs = [pl.BlockSpec((d_in, tile_m), lambda i: (0, i))]
    for li, (w, b) in enumerate(zip(weights, biases)):
        if li == num_layers - 1:
            w_k = w.T                 # (d_last, 1)
            b_k = b.reshape(1, 1)     # (1, 1)
        else:
            w_k = w                   # (d_out, d_in)
            b_k = b.reshape(-1, 1)    # (d_out, 1)
        args += [w_k, b_k]
        # Constant index maps: params are DMA'd once, VMEM-resident across
        # every batch tile of the grid.
        in_specs += [
            pl.BlockSpec(w_k.shape, lambda i: (0, 0)),
            pl.BlockSpec(b_k.shape, lambda i: (0, 0)),
        ]

    flops = 2 * batch * sum(int(w.size) for w in weights)
    bytes_accessed = (
        sum(int(a.size) * a.dtype.itemsize for a in args) + m_pad * 4
    )

    out = pl.pallas_call(
        functools.partial(_dar_kernel, num_layers),
        out_shape=jax.ShapeDtypeStruct((1, m_pad), jnp.float32),
        grid=(num_tiles,),
        in_specs=in_specs,
        out_specs=pl.BlockSpec((1, tile_m), lambda i: (0, i)),
        compiler_params=pltpu.CompilerParams(
            dimension_semantics=("parallel",)),
        cost_estimate=pl.CostEstimate(
            flops=flops, transcendentals=0, bytes_accessed=bytes_accessed),
    )(*args)

    return out[0, :batch].reshape(batch, 1).astype(x.dtype)


def init_dar_params(key, ar, num_layers=1, d_hidden=None):
    """Deterministic torch.nn.Linear-style init (uniform +-1/sqrt(fan_in))."""
    if d_hidden is None and num_layers > 1:
        d_hidden = ar
    if num_layers == 1:
        dims = [ar, 1]
    else:
        dims = [ar] + [d_hidden] * (num_layers - 1) + [1]
    weights, biases = [], []
    for i in range(num_layers):
        din, dout = dims[i], dims[i + 1]
        key, wk, bk = jax.random.split(key, 3)
        bound = 1.0 / float(din) ** 0.5
        weights.append(
            jax.random.uniform(wk, (dout, din), jnp.float32, -bound, bound))
        biases.append(
            jax.random.uniform(bk, (dout,), jnp.float32, -bound, bound))
    return key, weights, biases


def dar_reference(x, weights, biases):
    """Pure-JAX reference of DAR.forward (torch-layout params)."""
    h = x
    num_layers = len(weights)
    for i in range(num_layers):
        h = h @ weights[i].T + biases[i]
        if i < num_layers - 1:
            h = jnp.maximum(h, 0.0)
    return h


if __name__ == "__main__":
    key = jax.random.PRNGKey(0)

    ar = 32          # autoregressive order == d_in of layer_1
    num_layers = 3   # layer_1 -> 1 mid layer -> layer_out
    d_hidden = 32
    batch = 8

    key, weights, biases = init_dar_params(key, ar, num_layers, d_hidden)

    key, xk = jax.random.split(key)
    x = jax.random.uniform(xk, (batch, ar), jnp.float32, -1.0, 1.0)

    out = jax.block_until_ready(dar_forward(x, weights, biases))
    ref = dar_reference(x, weights, biases)
    assert out.shape == (batch, 1), out.shape
    assert jnp.allclose(out, ref, atol=1e-4, rtol=1e-4), "mismatch vs reference"

    # Larger batch: exercises multiple grid tiles, padding, resident weights.
    key, xk2 = jax.random.split(key)
    xb = jax.random.uniform(xk2, (1000, ar), jnp.float32, -1.0, 1.0)
    outb = jax.block_until_ready(dar_forward(xb, weights, biases))
    refb = dar_reference(xb, weights, biases)
    assert outb.shape == (1000, 1)
    assert jnp.allclose(outb, refb, atol=1e-4, rtol=1e-4), "mismatch (batched)"

    # num_layers == 1 path (pure Linear, no activation).
    key, w1, b1 = init_dar_params(key, ar, num_layers=1)
    out1 = jax.block_until_ready(dar_forward(x, w1, b1))
    ref1 = dar_reference(x, w1, b1)
    assert out1.shape == (batch, 1)
    assert jnp.allclose(out1, ref1, atol=1e-4, rtol=1e-4), "mismatch (1-layer)"

    print("KERNEL_OK")
</pallas_src>

<mosaic_0001>
module attributes {stable_mosaic.version = 11 : i64} {
  func.func @_dar_kernel(%arg0: i32, %arg1: memref<32x128xf32, #tpu.memory_space<vmem>>, %arg2: memref<32x32xf32, #tpu.memory_space<vmem>>, %arg3: memref<32x1xf32, #tpu.memory_space<vmem>>, %arg4: memref<32x32xf32, #tpu.memory_space<vmem>>, %arg5: memref<32x1xf32, #tpu.memory_space<vmem>>, %arg6: memref<32x1xf32, #tpu.memory_space<vmem>>, %arg7: memref<1x1xf32, #tpu.memory_space<vmem>>, %arg8: memref<1x128xf32, #tpu.memory_space<vmem>>) attributes {dimension_semantics = [#tpu.dimension_semantics<parallel>], iteration_bounds = array<i64: 1>, scalar_prefetch = 0 : i64, scratch_operands = 0 : i64, tpu.core_type = #tpu.core_type<tc>, window_params = [{transform_indices = @transform_0, window_bounds = array<i64: 32, 128>}, {pipeline_mode = #tpu.pipeline_mode<synchronous>, transform_indices = @transform_1, window_bounds = array<i64: 32, 32>}, {pipeline_mode = #tpu.pipeline_mode<synchronous>, transform_indices = @transform_2, window_bounds = array<i64: 32, 1>}, {pipeline_mode = #tpu.pipeline_mode<synchronous>, transform_indices = @transform_3, window_bounds = array<i64: 32, 32>}, {pipeline_mode = #tpu.pipeline_mode<synchronous>, transform_indices = @transform_4, window_bounds = array<i64: 32, 1>}, {pipeline_mode = #tpu.pipeline_mode<synchronous>, transform_indices = @transform_5, window_bounds = array<i64: 32, 1>}, {pipeline_mode = #tpu.pipeline_mode<synchronous>, transform_indices = @transform_6, window_bounds = array<i64: 1, 1>}, {transform_indices = @transform_7, window_bounds = array<i64: 1, 128>}]} {
    %c0 = arith.constant 0 : index
    %c0_0 = arith.constant 0 : index
    %0 = vector.load %arg1[%c0, %c0_0] : memref<32x128xf32, #tpu.memory_space<vmem>>, vector<32x128xf32>
    %c0_1 = arith.constant 0 : index
    %c0_2 = arith.constant 0 : index
    %1 = vector.load %arg2[%c0_1, %c0_2] : memref<32x32xf32, #tpu.memory_space<vmem>>, vector<32x32xf32>
    %c0_3 = arith.constant 0 : index
    %c0_4 = arith.constant 0 : index
    %2 = vector.load %arg3[%c0_3, %c0_4] : memref<32x1xf32, #tpu.memory_space<vmem>>, vector<32x1xf32>
    %cst = arith.constant dense<0.000000e+00> : vector<32x128xf32>
    %3 = tpu.matmul %1, %0, %cst {dimension_numbers = #tpu.dot_dimension_numbers<[1], [0], [0], [1], [0, 0, 1, 1], [], []>} : vector<32x32xf32>, vector<32x128xf32>, vector<32x128xf32> -> vector<32x128xf32>
    %4 = vector.broadcast %2 : vector<32x1xf32> to vector<32x128xf32>
    %5 = arith.addf %3, %4 : vector<32x128xf32>
    %cst_5 = arith.constant 0.000000e+00 : f32
    %6 = vector.broadcast %cst_5 : f32 to vector<32x128xf32>
    %7 = arith.maximumf %5, %6 : vector<32x128xf32>
    %c0_6 = arith.constant 0 : index
    %c0_7 = arith.constant 0 : index
    %8 = vector.load %arg4[%c0_6, %c0_7] : memref<32x32xf32, #tpu.memory_space<vmem>>, vector<32x32xf32>
    %c0_8 = arith.constant 0 : index
    %c0_9 = arith.constant 0 : index
    %9 = vector.load %arg5[%c0_8, %c0_9] : memref<32x1xf32, #tpu.memory_space<vmem>>, vector<32x1xf32>
    %cst_10 = arith.constant dense<0.000000e+00> : vector<32x128xf32>
    %10 = tpu.matmul %8, %7, %cst_10 {dimension_numbers = #tpu.dot_dimension_numbers<[1], [0], [0], [1], [0, 0, 1, 1], [], []>} : vector<32x32xf32>, vector<32x128xf32>, vector<32x128xf32> -> vector<32x128xf32>
    %11 = vector.broadcast %9 : vector<32x1xf32> to vector<32x128xf32>
    %12 = arith.addf %10, %11 : vector<32x128xf32>
    %cst_11 = arith.constant 0.000000e+00 : f32
    %13 = vector.broadcast %cst_11 : f32 to vector<32x128xf32>
    %14 = arith.maximumf %12, %13 : vector<32x128xf32>
    %c0_12 = arith.constant 0 : index
    %c0_13 = arith.constant 0 : index
    %15 = vector.load %arg6[%c0_12, %c0_13] : memref<32x1xf32, #tpu.memory_space<vmem>>, vector<32x1xf32>
    %c0_14 = arith.constant 0 : index
    %c0_15 = arith.constant 0 : index
    %16 = vector.load %arg7[%c0_14, %c0_15] : memref<1x1xf32, #tpu.memory_space<vmem>>, vector<1x1xf32>
    %17 = vector.broadcast %15 : vector<32x1xf32> to vector<32x128xf32>
    %18 = arith.mulf %14, %17 : vector<32x128xf32>
    %cst_16 = arith.constant dense<0.000000e+00> : vector<128xf32>
    %19 = vector.multi_reduction <add>, %18, %cst_16 [0] : vector<32x128xf32> to vector<128xf32>
    %20 = vector.shape_cast %19 : vector<128xf32> to vector<1x128xf32>
    %21 = vector.broadcast %16 : vector<1x1xf32> to vector<1x128xf32>
    %22 = arith.addf %20, %21 : vector<1x128xf32>
    %c0_17 = arith.constant 0 : index
    %c0_18 = arith.constant 0 : index
    %23 = vector.load %arg8[%c0_17, %c0_18] : memref<1x128xf32, #tpu.memory_space<vmem>>, vector<1x128xf32>
    tpu.vector_store %arg8[%c0_17, %c0_18], %22 {strides = array<i32>} : memref<1x128xf32, #tpu.memory_space<vmem>>, vector<1x128xf32>,
    return
  }
  func.func @transform_0(%arg0: i32) -> (i32, i32) {
    %c0_i32 = arith.constant 0 : i32
    %c0_i32_0 = arith.constant 0 : i32
    return %c0_i32, %arg0 : i32, i32
  }
  func.func @transform_1(%arg0: i32) -> (i32, i32) {
    %c0_i32 = arith.constant 0 : i32
    %c0_i32_0 = arith.constant 0 : i32
    %c0_i32_1 = arith.constant 0 : i32
    return %c0_i32, %c0_i32_0 : i32, i32
  }
  func.func @transform_2(%arg0: i32) -> (i32, i32) {
    %c0_i32 = arith.constant 0 : i32
    %c0_i32_0 = arith.constant 0 : i32
    %c0_i32_1 = arith.constant 0 : i32
    return %c0_i32, %c0_i32_0 : i32, i32
  }
  func.func @transform_3(%arg0: i32) -> (i32, i32) {
    %c0_i32 = arith.constant 0 : i32
    %c0_i32_0 = arith.constant 0 : i32
    %c0_i32_1 = arith.constant 0 : i32
    return %c0_i32, %c0_i32_0 : i32, i32
  }
  func.func @transform_4(%arg0: i32) -> (i32, i32) {
    %c0_i32 = arith.constant 0 : i32
    %c0_i32_0 = arith.constant 0 : i32
    %c0_i32_1 = arith.constant 0 : i32
    return %c0_i32, %c0_i32_0 : i32, i32
  }
  func.func @transform_5(%arg0: i32) -> (i32, i32) {
    %c0_i32 = arith.constant 0 : i32
    %c0_i32_0 = arith.constant 0 : i32
    %c0_i32_1 = arith.constant 0 : i32
    return %c0_i32, %c0_i32_0 : i32, i32
  }
  func.func @transform_6(%arg0: i32) -> (i32, i32) {
    %c0_i32 = arith.constant 0 : i32
    %c0_i32_0 = arith.constant 0 : i32
    %c0_i32_1 = arith.constant 0 : i32
    return %c0_i32, %c0_i32_0 : i32, i32
  }
  func.func @transform_7(%arg0: i32) -> (i32, i32) {
    %c0_i32 = arith.constant 0 : i32
    %c0_i32_0 = arith.constant 0 : i32
    return %c0_i32, %arg0 : i32, i32
  }
}

</mosaic_0001>

<llo_original>
// kernel: tpu_custom_call.1
$region0: #{tpu_custom_call.1}
  #allocation0 [shape = 'u32[]', space=smem, size = 0x4, offset = 0x4, fixed_abs, tag = 'smem constant byte address 0x4 - core index']
  #allocation1 [shape = 'u32[144,128]{1,0:T(1,128)}', space=vmem, size = 0x12000, scoped, tag = 'internal scratch']
  #allocation2 [shape = 'f32[1,1]{1,0:T(1,128)S(1)}', space=vmem, size = 0x200, scoped, tag = 'scoped memory for tpu_custom_call.1']
  %s0 = inlined_call_operand.vmem [shape: f32[32,128], index: 0, kind: input, shape index: {}]
  %s1 = inlined_call_operand.vmem [shape: f32[32,32], index: 1, kind: input, shape index: {}]
  %s2 = inlined_call_operand.vmem [shape: f32[32,1], index: 2, kind: input, shape index: {}]
  %s3 = inlined_call_operand.vmem [shape: f32[32,32], index: 3, kind: input, shape index: {}]
  %s4 = inlined_call_operand.vmem [shape: f32[32,1], index: 4, kind: input, shape index: {}]
  %s5 = inlined_call_operand.vmem [shape: f32[32,1], index: 5, kind: input, shape index: {}]
  %s6 = inlined_call_operand.<no memory space> [shape: f32[1,1], index: 6, kind: input, shape index: {}]
  %s7 = inlined_call_operand.hbm [shape: f32[1,128], index: 7, kind: output, shape index: {}]
  %s8 = sld [smem:[#allocation0]]
  $region38: #{tpu_custom_call.1} parent=0
    _
  %s10 = ssub.s32 1, %s8
  %s11 = scalar_select 0, %s10, %s8
  %v12 = vstv %s6
  %13 = vst [vmem:[#allocation2] sm:$0x1] %v12
  $region1: #{tpu_custom_call.1} parent=0
    #allocation3 [shape = 'u8[512]{0}', space=vmem, size = 0x400, scoped, tag = 'output window, operand 0, single buffered']
    #allocation4 [shape = 's32[1]{0}', space=sflag, size = 0x4, scoped, tag = 'scoped memory for tpu_custom_call.1']
    %14 = vsyncpa [#allocation4], 0
    // Predicated region
    $region2: #{tpu_custom_call.1} parent=1 // pred_check
      _
    $region3: #{tpu_custom_call.1} parent=1 // pred_check_branch
      %16 = sbr.rel (0) target = $region5
    $region4: #{tpu_custom_call.1} parent=1 // pred_region
      _
    $region5: #{tpu_custom_call.1} parent=1 // pred_fallthru
      _
    // Predicated region
    $region6: #{tpu_custom_call.1} parent=1 // pred_check
      _
    $region7: #{tpu_custom_call.1} parent=1 // pred_check_branch
      %18 = sbr.rel (0) target = $region9
    $region8: #{tpu_custom_call.1} parent=1 // pred_region
      _
    $region9: #{tpu_custom_call.1} parent=1 // pred_fallthru
      _
    // Predicated region
    $region10: #{tpu_custom_call.1} parent=1 // pred_check
      _
    $region11: #{tpu_custom_call.1} parent=1 // pred_check_branch
      %20 = sbr.rel (0) target = $region13
    $region12: #{tpu_custom_call.1} parent=1 // pred_region
      _
    $region13: #{tpu_custom_call.1} parent=1 // pred_fallthru
      _
    // Predicated region
    $region14: #{tpu_custom_call.1} parent=1 // pred_check
      _
    $region15: #{tpu_custom_call.1} parent=1 // pred_check_branch
      %22 = sbr.rel (0) target = $region17
    $region16: #{tpu_custom_call.1} parent=1 // pred_region
      _
    $region17: #{tpu_custom_call.1} parent=1 // pred_fallthru
      _
    // Predicated region
    $region18: #{tpu_custom_call.1} parent=1 // pred_check
      _
    $region19: #{tpu_custom_call.1} parent=1 // pred_check_branch
      %24 = sbr.rel (0) target = $region21
    $region20: #{tpu_custom_call.1} parent=1 // pred_region
      _
    $region21: #{tpu_custom_call.1} parent=1 // pred_fallthru
      _
    // Predicated region
    $region22: #{tpu_custom_call.1} parent=1 // pred_check
      _
    $region23: #{tpu_custom_call.1} parent=1 // pred_check_branch
      %26 = sbr.rel (0) target = $region25
    $region24: #{tpu_custom_call.1} parent=1 // pred_region
      _
    $region25: #{tpu_custom_call.1} parent=1 // pred_fallthru
      _
    // Predicated region
    $region26: #{tpu_custom_call.1} parent=1 // pred_check
      _
    $region27: #{tpu_custom_call.1} parent=1 // pred_check_branch
      %28 = sbr.rel (0) target = $region29
    $region28: #{tpu_custom_call.1} parent=1 // pred_region
      _
    $region29: #{tpu_custom_call.1} parent=1 // pred_fallthru
      _
    %v29 = vld [vmem:[%s0] sm:$0xff]
    %v30 = vld [vmem:[%s0 + $0x8] sm:$0xff]
    %v31 = vld [vmem:[%s0 + $0x10] sm:$0xff]
    %v32 = vld [vmem:[%s0 + $0x18] sm:$0xff]
    %v33 = vld [vmem:[%s1] sm:$0xff]
    %v34 = vld [vmem:[%s1 + $0x8] sm:$0xff]
    %v35 = vld [vmem:[%s1 + $0x10] sm:$0xff]
    %v36 = vld [vmem:[%s1 + $0x18] sm:$0xff]
    %v37 = vld [vmem:[%s2] sm:$0xff]
    %v38 = vld [vmem:[%s2 + $0x8] sm:$0xff]
    %v39 = vld [vmem:[%s2 + $0x10] sm:$0xff]
    %v40 = vld [vmem:[%s2 + $0x18] sm:$0xff]
    %42 = vset.pattern.permute.xlu0 0
    %43 = vperm.xlu0 %42, %v37
    %v44 = vpop.permute.xlu0 %43
    %47 = vset.pattern.permute.xlu0 0
    %48 = vperm.xlu0 %47, %v38
    %v49 = vpop.permute.xlu0 %48
    %52 = vset.pattern.permute.xlu0 0
    %53 = vperm.xlu0 %52, %v39
    %v54 = vpop.permute.xlu0 %53
    %57 = vset.pattern.permute.xlu0 0
    %58 = vperm.xlu0 %57, %v40
    %v59 = vpop.permute.xlu0 %58
    %vm61 = vcmask 261120
    %v63 = vsel %vm61, %v33, 0
    %v66 = vsel %vm61, %v34, 0
    %v69 = vsel %vm61, %v35, 0
    %v72 = vsel %vm61, %v36, 0
    %74 = vmatprep.subr.mxu0 0.0
    %75 = vmatpush1.msra.mxu0 %v29
    %76 = vmatprep.subr.mxu0 0.0
    %77 = vmatpush1.msra.mxu0 %v30
    %78 = vmatprep.subr.mxu0 0.0
    %79 = vmatpush1.msra.mxu0 %v31
    %80 = vmatprep.subr.mxu0 0.0
    %81 = vmatpush1.msra.mxu0 %v32
    %82 = vmatprep.subr.mxu0 0.0
    %83 = vmatpush1.msra.mxu0 0.0
    %84 = vmatprep.subr.mxu0 0.0
    %85 = vmatpush1.msra.mxu0 0.0
    %86 = vmatprep.subr.mxu0 0.0
    %87 = vmatpush1.msra.mxu0 0.0
    %88 = vmatprep.subr.mxu0 0.0
    %89 = vmatpush1.msra.mxu0 0.0
    %90 = vmatprep.subr.mxu0 0.0
    %91 = vmatpush1.msra.mxu0 0.0
    %92 = vmatprep.subr.mxu0 0.0
    %93 = vmatpush1.msra.mxu0 0.0
    %94 = vmatprep.subr.mxu0 0.0
    %95 = vmatpush1.msra.mxu0 0.0
    %96 = vmatprep.subr.mxu0 0.0
    %97 = vmatpush1.msra.mxu0 0.0
    %98 = vmatprep.subr.mxu0 0.0
    %99 = vmatpush1.msra.mxu0 0.0
    %100 = vmatprep.subr.mxu0 0.0
    %101 = vmatpush1.msra.mxu0 0.0
    %102 = vmatprep.subr.mxu0 0.0
    %103 = vmatpush1.msra.mxu0 0.0
    %104 = vmatprep.subr.mxu0 0.0
    %105 = vmatpush1.msra.mxu0 0.0
    %106 = vmatprep.subr.mxu0 0.0
    %107 = vmatpush1.msra.mxu0 0.0
    %108 = vmatprep.subr.mxu0 0.0
    %109 = vmatpush1.msra.mxu0 0.0
    %110 = vmatprep.subr.mxu0 0.0
    %111 = vmatpush1.msra.mxu0 0.0
    %112 = vmatprep.subr.mxu0 0.0
    %113 = vmatpush1.msra.mxu0 0.0
    %114 = vmatprep.subr.mxu0 0.0
    %115 = vmatpush1.msra.mxu0 0.0
    %116 = vmatprep.subr.mxu0 0.0
    %117 = vmatpush1.msra.mxu0 0.0
    %118 = vmatprep.subr.mxu0 0.0
    %119 = vmatpush1.msra.mxu0 0.0
    %120 = vmatprep.subr.mxu0 0.0
    %121 = vmatpush1.msra.mxu0 0.0
    %122 = vmatprep.subr.mxu0 0.0
    %123 = vmatpush1.msra.mxu0 0.0
    %124 = vmatprep.subr.mxu0 0.0
    %125 = vmatpush1.msra.mxu0 0.0
    %126 = vmatprep.subr.mxu0 0.0
    %127 = vmatpush1.msra.mxu0 0.0
    %128 = vmatprep.subr.mxu0 0.0
    %129 = vmatpush1.msra.mxu0 0.0
    %130 = vmatprep.subr.mxu0 0.0
    %131 = vmatpush1.msra.mxu0 0.0
    %132 = vmatprep.subr.mxu0 0.0
    %133 = vmatpush1.msra.mxu0 0.0
    %134 = vmatprep.subr.mxu0 0.0
    %135 = vmatpush1.msra.mxu0 0.0
    %136 = vmatprep.subr.mxu0 0.0
    %137 = vmatpush1.msra.mxu0 0.0
    %138 = vmatprep.mubr.f32.mxu0 0.0
    %139 = vmatmul.mubr.f32.gmra.mrb[0].mxu0 %v63
    %v140 = vpop.f32.mrb[0].mxu0
    %v141 = vadd.f32 %v44, %v140
    %v142 = vpop.f32.mrb[0].mxu0
    %143 = vmatprep.mubr.f32.mxu0 0.0
    %144 = vmatmul.mubr.f32.gmra.mrb[0].mxu0 %v66
    %v145 = vpop.f32.mrb[0].mxu0
    %v146 = vadd.f32 %v49, %v145
    %v147 = vpop.f32.mrb[0].mxu0
    %148 = vmatprep.mubr.f32.mxu0 0.0
    %149 = vmatmul.mubr.f32.gmra.mrb[0].mxu0 %v69
    %v150 = vpop.f32.mrb[0].mxu0
    %v151 = vadd.f32 %v54, %v150
    %v152 = vpop.f32.mrb[0].mxu0
    %153 = vmatprep.mubr.f32.mxu0 0.0
    %154 = vmatmul.mubr.f32.gmra.mrb[0].mxu0 %v72
    %v155 = vpop.f32.mrb[0].mxu0
    %v156 = vadd.f32 %v59, %v155
    %v157 = vpop.f32.mrb[0].mxu0
    %158 = vdwg.mxu0
    %v159 = vmax.f32 %v141, 0.0
    %v160 = vmax.f32 %v146, 0.0
    %v161 = vmax.f32 %v151, 0.0
    %v162 = vmax.f32 %v156, 0.0
    %v163 = vld [vmem:[%s3] sm:$0xff]
    %v164 = vld [vmem:[%s3 + $0x8] sm:$0xff]
    %v165 = vld [vmem:[%s3 + $0x10] sm:$0xff]
    %v166 = vld [vmem:[%s3 + $0x18] sm:$0xff]
    %v167 = vld [vmem:[%s4] sm:$0xff]
    %v168 = vld [vmem:[%s4 + $0x8] sm:$0xff]
    %v169 = vld [vmem:[%s4 + $0x10] sm:$0xff]
    %v170 = vld [vmem:[%s4 + $0x18] sm:$0xff]
    %172 = vset.pattern.permute.xlu0 0
    %173 = vperm.xlu0 %172, %v167
    %v174 = vpop.permute.xlu0 %173
    %177 = vset.pattern.permute.xlu0 0
    %178 = vperm.xlu0 %177, %v168
    %v179 = vpop.permute.xlu0 %178
    %182 = vset.pattern.permute.xlu0 0
    %183 = vperm.xlu0 %182, %v169
    %v184 = vpop.permute.xlu0 %183
    %187 = vset.pattern.permute.xlu0 0
    %188 = vperm.xlu0 %187, %v170
    %v189 = vpop.permute.xlu0 %188
    %v192 = vsel %vm61, %v163, 0
    %v195 = vsel %vm61, %v164, 0
    %v198 = vsel %vm61, %v165, 0
    %v201 = vsel %vm61, %v166, 0
    %203 = vmatprep.subr.mxu0 0.0
    %204 = vmatpush1.msra.mxu0 %v159
    %205 = vmatprep.subr.mxu0 0.0
    %206 = vmatpush1.msra.mxu0 %v160
    %207 = vmatprep.subr.mxu0 0.0
    %208 = vmatpush1.msra.mxu0 %v161
    %209 = vmatprep.subr.mxu0 0.0
    %210 = vmatpush1.msra.mxu0 %v162
    %211 = vmatprep.subr.mxu0 0.0
    %212 = vmatpush1.msra.mxu0 0.0
    %213 = vmatprep.subr.mxu0 0.0
    %214 = vmatpush1.msra.mxu0 0.0
    %215 = vmatprep.subr.mxu0 0.0
    %216 = vmatpush1.msra.mxu0 0.0
    %217 = vmatprep.subr.mxu0 0.0
    %218 = vmatpush1.msra.mxu0 0.0
    %219 = vmatprep.subr.mxu0 0.0
    %220 = vmatpush1.msra.mxu0 0.0
    %221 = vmatprep.subr.mxu0 0.0
    %222 = vmatpush1.msra.mxu0 0.0
    %223 = vmatprep.subr.mxu0 0.0
    %224 = vmatpush1.msra.mxu0 0.0
    %225 = vmatprep.subr.mxu0 0.0
    %226 = vmatpush1.msra.mxu0 0.0
    %227 = vmatprep.subr.mxu0 0.0
    %228 = vmatpush1.msra.mxu0 0.0
    %229 = vmatprep.subr.mxu0 0.0
    %230 = vmatpush1.msra.mxu0 0.0
    %231 = vmatprep.subr.mxu0 0.0
    %232 = vmatpush1.msra.mxu0 0.0
    %233 = vmatprep.subr.mxu0 0.0
    %234 = vmatpush1.msra.mxu0 0.0
    %235 = vmatprep.subr.mxu0 0.0
    %236 = vmatpush1.msra.mxu0 0.0
    %237 = vmatprep.subr.mxu0 0.0
    %238 = vmatpush1.msra.mxu0 0.0
    %239 = vmatprep.subr.mxu0 0.0
    %240 = vmatpush1.msra.mxu0 0.0
    %241 = vmatprep.subr.mxu0 0.0
    %242 = vmatpush1.msra.mxu0 0.0
    %243 = vmatprep.subr.mxu0 0.0
    %244 = vmatpush1.msra.mxu0 0.0
    %245 = vmatprep.subr.mxu0 0.0
    %246 = vmatpush1.msra.mxu0 0.0
    %247 = vmatprep.subr.mxu0 0.0
    %248 = vmatpush1.msra.mxu0 0.0
    %249 = vmatprep.subr.mxu0 0.0
    %250 = vmatpush1.msra.mxu0 0.0
    %251 = vmatprep.subr.mxu0 0.0
    %252 = vmatpush1.msra.mxu0 0.0
    %253 = vmatprep.subr.mxu0 0.0
    %254 = vmatpush1.msra.mxu0 0.0
    %255 = vmatprep.subr.mxu0 0.0
    %256 = vmatpush1.msra.mxu0 0.0
    %257 = vmatprep.subr.mxu0 0.0
    %258 = vmatpush1.msra.mxu0 0.0
    %259 = vmatprep.subr.mxu0 0.0
    %260 = vmatpush1.msra.mxu0 0.0
    %261 = vmatprep.subr.mxu0 0.0
    %262 = vmatpush1.msra.mxu0 0.0
    %263 = vmatprep.subr.mxu0 0.0
    %264 = vmatpush1.msra.mxu0 0.0
    %265 = vmatprep.subr.mxu0 0.0
    %266 = vmatpush1.msra.mxu0 0.0
    %267 = vmatprep.mubr.f32.mxu0 0.0
    %268 = vmatmul.mubr.f32.gmra.mrb[0].mxu0 %v192
    %v269 = vpop.f32.mrb[0].mxu0
    %v270 = vadd.f32 %v174, %v269
    %v271 = vpop.f32.mrb[0].mxu0
    %272 = vmatprep.mubr.f32.mxu0 0.0
    %273 = vmatmul.mubr.f32.gmra.mrb[0].mxu0 %v195
    %v274 = vpop.f32.mrb[0].mxu0
    %v275 = vadd.f32 %v179, %v274
    %v276 = vpop.f32.mrb[0].mxu0
    %277 = vmatprep.mubr.f32.mxu0 0.0
    %278 = vmatmul.mubr.f32.gmra.mrb[0].mxu0 %v198
    %v279 = vpop.f32.mrb[0].mxu0
    %v280 = vadd.f32 %v184, %v279
    %v281 = vpop.f32.mrb[0].mxu0
    %282 = vmatprep.mubr.f32.mxu0 0.0
    %283 = vmatmul.mubr.f32.gmra.mrb[0].mxu0 %v201
    %v284 = vpop.f32.mrb[0].mxu0
    %v285 = vadd.f32 %v189, %v284
    %v286 = vpop.f32.mrb[0].mxu0
    %287 = vdwg.mxu0
    %v288 = vmax.f32 %v270, 0.0
    %v289 = vmax.f32 %v275, 0.0
    %v290 = vmax.f32 %v280, 0.0
    %v291 = vmax.f32 %v285, 0.0
    %v292 = vld [vmem:[%s5] sm:$0xff]
    %v293 = vld [vmem:[%s5 + $0x8] sm:$0xff]
    %v294 = vld [vmem:[%s5 + $0x10] sm:$0xff]
    %v295 = vld [vmem:[%s5 + $0x18] sm:$0xff]
    %v296 = vld [vmem:[#allocation2] sm:$0x1]
    %298 = vset.pattern.permute.xlu0 0
    %299 = vperm.xlu0 %298, %v292
    %v300 = vpop.permute.xlu0 %299
    %303 = vset.pattern.permute.xlu0 0
    %304 = vperm.xlu0 %303, %v293
    %v305 = vpop.permute.xlu0 %304
    %308 = vset.pattern.permute.xlu0 0
    %309 = vperm.xlu0 %308, %v294
    %v310 = vpop.permute.xlu0 %309
    %313 = vset.pattern.permute.xlu0 0
    %314 = vperm.xlu0 %313, %v295
    %v315 = vpop.permute.xlu0 %314
    %v317 = vmul.f32 %v288, %v300
    %v318 = vmul.f32 %v289, %v305
    %v319 = vmul.f32 %v290, %v310
    %v320 = vmul.f32 %v291, %v315
    %v321 = vadd.f32 %v317, %v318
    %v322 = vadd.f32 %v321, %v319
    %v323 = vadd.f32 %v322, %v320
    %v324 = vrot.slane %v323, 4
    %v325 = vadd.f32 %v323, %v324
    %v326 = vrot.slane %v325, 2
    %v327 = vadd.f32 %v325, %v326
    %v328 = vrot.slane %v327, 1
    %v329 = vadd.f32 %v327, %v328
    %331 = vset.pattern.permute.xlu0 0
    %332 = vperm.xlu0 %331, %v296
    %v333 = vpop.permute.xlu0 %332
    %v335 = vlaneseq
    %v336 = vshrl.u32 %v335, 7
    %v337 = vsub.s32 0, %v336
    %v338 = vrot.slane %v333, %v337
    %v339 = vadd.f32 %v329, %v338
    %340 = vst [vmem:[#allocation3] sm:$0x1] %v339
    // Predicated region
    $region30: #{tpu_custom_call.1} parent=1 // pred_check
      _
    $region31: #{tpu_custom_call.1} parent=1 // pred_check_branch
      %342 = sbr.rel (0) target = $region33
    $region32: #{tpu_custom_call.1} parent=1 // pred_region
      %s344 = ssub.s32 16, 16
      %345 = vsyncadd [#allocation4], %s344
      %s347 = sshll.u32 [#allocation3], 4
      %s348 = int_to_ptr.vmem [resolvable:$true] %s347
      %350 = dma.vmem_to_hbm [thread:$0]  %s348, 16, %s7, [#allocation4]
    $region33: #{tpu_custom_call.1} parent=1 // pred_fallthru
      _
    // Predicated region
    $region34: #{tpu_custom_call.1} parent=1 // pred_check
      _
    $region35: #{tpu_custom_call.1} parent=1 // pred_check_branch
      %352 = sbr.rel (0) target = $region37
    $region36: #{tpu_custom_call.1} parent=1 // pred_region
      %353 = dma.done [#allocation4], 16
    $region37: #{tpu_custom_call.1} parent=1 // pred_fallthru
      _
    %354 = vsyncpa [#allocation4], 1

</llo_original>
